<compile_context>
chip_gen: v7x
topology: tpu7x:2x2x1
jax: 0.10.0
libtpu: 0.0.40
codegen_flags: <defaults>
</compile_context>

<pallas_src>
import functools

import jax
import jax.numpy as jnp
from jax.experimental import pallas as pl
from jax.experimental.pallas import tpu as pltpu


def _drawnet_head_kernel(x_ref, w_ref, b_ref, o_ref, acc_ref, *, inv_hw):
    """One grid step: accumulate a partial spatial sum; finalize with the matmul.

    x_ref  : [TB, THW, C]  backbone features (bf16), channels on the lane axis
    w_ref  : [C, Npad]     f32 linear weight (in, out), resident in VMEM
    b_ref  : [1, Npad]     f32 linear bias
    o_ref  : [TB, Npad]    f32 logits (class axis padded to a lane multiple)
    acc_ref: [TB, C]       f32 pooled-sum accumulator (persists across hw steps)
    """
    j = pl.program_id(1)  # spatial-reduction step (innermost, "arbitrary")

    @pl.when(j == 0)
    def _init():
        acc_ref[...] = jnp.zeros_like(acc_ref)

    # Fused cast-into-reduce: bf16 block summed straight into the f32
    # accumulator -- no full-block f32 temporary kept live in VMEM.
    acc_ref[...] += jnp.sum(x_ref[...], axis=1, dtype=jnp.float32)

    @pl.when(j == pl.num_programs(1) - 1)
    def _finalize():
        pooled = acc_ref[...] * inv_hw                              # [TB, C]
        # TODO(synk): F.dropout2d(p=0.4) is stochastic channel dropout; this
        # kernel implements inference semantics (identity).  A training-mode
        # version needs pltpu.prng_seed/prng_random_bits + 1/(1-p) scaling.
        o_ref[...] = (jnp.dot(pooled, w_ref[...],
                              preferred_element_type=jnp.float32)
                      + b_ref[...])                                 # [TB, Npad]


def prepare_head_params(weight, bias):
    """One-time (model init) prep: (out, in) -> (in, out padded to 128 lanes)."""
    num_classes, c = weight.shape
    n_pad = ((num_classes + 127) // 128) * 128
    w_t = jnp.zeros((c, n_pad), jnp.float32).at[:, :num_classes].set(
        weight.T.astype(jnp.float32))
    b_p = jnp.zeros((1, n_pad), jnp.float32).at[:, :num_classes].set(
        bias.astype(jnp.float32)[None, :])
    return w_t, b_p, num_classes


def _detect_vmem_bytes(default_bytes=64 * 1024 * 1024):
    """Physical VMEM per TensorCore, with a conservative (v7x-sized) fallback."""
    try:
        info = pltpu.get_tpu_info()
        for attr in ("vmem_capacity_bytes", "vmem_bytes", "vmem_size_bytes"):
            val = getattr(info, attr, None)
            if val:
                return int(val)
    except Exception:  # pragma: no cover - interpret mode / CPU tracing
        pass
    return default_bytes


def _choose_tiles(B, HW, C, n_pad, feat_bytes, vmem_limit_bytes):
    """Pick (batch_tile, spatial_tile) so that the resident weight plus the
    double-buffered feature/output blocks and kernel temporaries fit the scoped
    VMEM limit with headroom.  No artificial cap on the batch tile."""
    # Spatial tile: largest divisor of HW that is a multiple of 8 and yields
    # >= 2 reduction steps (pipelining even for single-batch-tile grids);
    # otherwise the full spatial extent (block dim == full array dim).
    thw = HW
    for cand in range(HW // 2, 7, -1):
        if HW % cand == 0 and cand % 8 == 0:
            thw = cand
            break

    headroom = 2 * 1024 * 1024
    # Pallas double-buffers every BlockSpec, including the constant-index
    # weight/bias, so count them twice.
    resident = 2 * (C * n_pad * 4 + n_pad * 4)
    per_row = (2 * thw * C * feat_bytes   # double-buffered feature block
               + thw * C * 4              # worst-case f32 temp of fused reduce
               + 2 * n_pad * 4            # double-buffered output block
               + C * 4                    # accumulator scratch
               + n_pad * 4)               # matmul result temp
    avail = vmem_limit_bytes - headroom - resident

    if avail <= per_row * 8:              # weight nearly fills the budget
        tb = min(B, 8)
    else:
        tb = avail // per_row
        if tb >= B:
            tb = B
        else:
            tb = max(8, (tb // 8) * 8)    # sublane-aligned batch tile
    return int(tb), int(thw)


def drawnet_head(features_nhwc, w_t, b_p, num_classes, *, training=False,
                 tb=None, thw=None):
    """features_nhwc: [B, H, W, C] (bf16 preferred); w_t: [C, Npad]; b_p: [1, Npad]."""
    if training:
        raise NotImplementedError(
            "dropout2d(p=0.4) training mode is not implemented in this kernel")

    B, H, W, C = features_nhwc.shape
    HW = H * W
    n_pad = w_t.shape[1]

    # Free only if the backbone emits NHWC-contiguous features; an NCHW
    # backbone must be transposed once at the backbone boundary instead
    # (a hidden relayout here would cost more than the whole kernel).
    x = features_nhwc.reshape(B, HW, C)
    feat_bytes = x.dtype.itemsize

    vmem_phys = _detect_vmem_bytes()
    # v5e/v6e (128 MiB physical) -> 96 MiB scoped limit; v7x (64 MiB) -> 48 MiB.
    vmem_limit = int(min(100 * 1024 * 1024, (vmem_phys * 3) // 4))

    auto_tb, auto_thw = _choose_tiles(B, HW, C, n_pad, feat_bytes, vmem_limit)
    tb = auto_tb if tb is None else tb
    thw = auto_thw if thw is None else thw
    assert HW % thw == 0, "spatial tile must divide H*W"

    cost = pl.CostEstimate(
        flops=2 * B * C * n_pad,
        transcendentals=0,
        bytes_accessed=(B * HW * C * feat_bytes + C * n_pad * 4
                        + n_pad * 4 + B * n_pad * 4))

    kernel = functools.partial(_drawnet_head_kernel, inv_hw=1.0 / HW)

    out = pl.pallas_call(
        kernel,
        out_shape=jax.ShapeDtypeStruct((B, n_pad), jnp.float32),
        grid_spec=pltpu.PrefetchScalarGridSpec(
            num_scalar_prefetch=0,
            grid=(pl.cdiv(B, tb), HW // thw),      # reduction axis innermost
            in_specs=[
                pl.BlockSpec((tb, thw, C), lambda i, j: (i, j, 0)),
                pl.BlockSpec((C, n_pad), lambda i, j: (0, 0)),   # resident weight
                pl.BlockSpec((1, n_pad), lambda i, j: (0, 0)),   # resident bias
            ],
            out_specs=pl.BlockSpec((tb, n_pad), lambda i, j: (i, 0)),
            scratch_shapes=[pltpu.VMEM((tb, C), jnp.float32)],
        ),
        compiler_params=pltpu.CompilerParams(
            # TODO(synk): on v7x, switch the batch axis to pltpu.CORE_PARALLEL
            # (and cap tb at cdiv(B, 2)) to engage both TensorCores.
            dimension_semantics=("parallel", "arbitrary"),
            vmem_limit_bytes=vmem_limit),
        cost_estimate=cost,
    )(x, w_t, b_p)

    return out[:, :num_classes]


def reference_head(features_nhwc, weight, bias):
    pooled = jnp.mean(features_nhwc.astype(jnp.float32), axis=(1, 2))  # [B, C]
    return pooled @ weight.T.astype(jnp.float32) + bias.astype(jnp.float32)


def _make_linear(key, num_classes, c):
    """Deterministic nn.Linear-style init: U(-1/sqrt(C), 1/sqrt(C))."""
    k_w, k_b = jax.random.split(key)
    bound = 1.0 / jnp.sqrt(jnp.float32(c))
    weight = jax.random.uniform(k_w, (num_classes, c), jnp.float32, -bound, bound)
    bias = jax.random.uniform(k_b, (num_classes,), jnp.float32, -bound, bound)
    return weight, bias


if __name__ == "__main__":
    key = jax.random.PRNGKey(0)
    k_feat, k_lin, k_feat2, k_lin2 = jax.random.split(key, 4)

    # --- Main case: shapes consistent with DrawNet('resnet18') at small size:
    # ftr_num=512, num_classes=340, 8x8 feature map, batch=2.
    B, H, W, C = 2, 8, 8, 512
    NUM_CLASSES = 340

    # Backbone is external; its bf16 NHWC feature map is the kernel input.
    features = jax.random.normal(k_feat, (B, H, W, C), dtype=jnp.float32)
    features = features.astype(jnp.bfloat16)
    weight, bias = _make_linear(k_lin, NUM_CLASSES, C)

    # One-time parameter prep (hoisted out of the per-call hot path).
    w_t, b_p, n_cls = prepare_head_params(weight, bias)

    out = drawnet_head(features, w_t, b_p, n_cls)
    jax.block_until_ready(out)

    ref = reference_head(features, weight, bias)
    assert out.shape == (B, NUM_CLASSES)
    assert jnp.allclose(out, ref, atol=1e-4, rtol=1e-4)

    # --- Tiling / tail case: B not divisible by the batch tile and a
    # multi-step spatial-reduction grid (exercises pl.when init/finalize and
    # clipped tail-block writeback).
    B2, H2, W2, C2, NCLS2 = 10, 4, 4, 256, 40
    features2 = jax.random.normal(k_feat2, (B2, H2, W2, C2),
                                  dtype=jnp.float32).astype(jnp.bfloat16)
    weight2, bias2 = _make_linear(k_lin2, NCLS2, C2)
    w_t2, b_p2, n_cls2 = prepare_head_params(weight2, bias2)

    out2 = drawnet_head(features2, w_t2, b_p2, n_cls2, tb=8, thw=8)
    jax.block_until_ready(out2)
    ref2 = reference_head(features2, weight2, bias2)
    assert out2.shape == (B2, NCLS2)
    assert jnp.allclose(out2, ref2, atol=1e-4, rtol=1e-4)

    print("KERNEL_OK")
</pallas_src>

<mosaic_0001>
module attributes {stable_mosaic.version = 11 : i64} {
  func.func @_drawnet_head_kernel(%arg0: i32, %arg1: i32, %arg2: memref<2x32x512xbf16, #tpu.memory_space<vmem>>, %arg3: memref<512x384xf32, #tpu.memory_space<vmem>>, %arg4: memref<1x384xf32, #tpu.memory_space<vmem>>, %arg5: memref<2x384xf32, #tpu.memory_space<vmem>>, %arg6: memref<2x512xf32, #tpu.memory_space<vmem>>) attributes {dimension_semantics = [#tpu.dimension_semantics<parallel>, #tpu.dimension_semantics<arbitrary>], iteration_bounds = array<i64: 1, 2>, scalar_prefetch = 0 : i64, scratch_operands = 1 : i64, tpu.core_type = #tpu.core_type<tc>, window_params = [{transform_indices = @transform_0, window_bounds = array<i64: 2, 32, 512>}, {pipeline_mode = #tpu.pipeline_mode<synchronous>, transform_indices = @transform_1, window_bounds = array<i64: 512, 384>}, {pipeline_mode = #tpu.pipeline_mode<synchronous>, transform_indices = @transform_2, window_bounds = array<i64: 1, 384>}, {transform_indices = @transform_3, window_bounds = array<i64: 2, 384>}]} {
    %c0_i32 = arith.constant 0 : i32
    %0 = arith.cmpi eq, %arg1, %c0_i32 : i32
    %1 = arith.extui %0 : i1 to i32
    %c0_i32_0 = arith.constant 0 : i32
    %2 = arith.cmpi ne, %1, %c0_i32_0 : i32
    scf.if %2 {
      %cst_8 = arith.constant 0.000000e+00 : f32
      %12 = vector.broadcast %cst_8 : f32 to vector<2x512xf32>
      %c0_9 = arith.constant 0 : index
      %c0_10 = arith.constant 0 : index
      %13 = vector.load %arg6[%c0_9, %c0_10] : memref<2x512xf32, #tpu.memory_space<vmem>>, vector<2x512xf32>
      tpu.vector_store %arg6[%c0_9, %c0_10], %12 {strides = array<i32>} : memref<2x512xf32, #tpu.memory_space<vmem>>, vector<2x512xf32>,
    } else {
    }
    %c0 = arith.constant 0 : index
    %c0_1 = arith.constant 0 : index
    %3 = vector.load %arg6[%c0, %c0_1] : memref<2x512xf32, #tpu.memory_space<vmem>>, vector<2x512xf32>
    %c0_2 = arith.constant 0 : index
    %c0_3 = arith.constant 0 : index
    %c0_4 = arith.constant 0 : index
    %4 = vector.load %arg2[%c0_2, %c0_3, %c0_4] : memref<2x32x512xbf16, #tpu.memory_space<vmem>>, vector<2x32x512xbf16>
    %5 = arith.extf %4 : vector<2x32x512xbf16> to vector<2x32x512xf32>
    %cst = arith.constant dense<0.000000e+00> : vector<2x512xf32>
    %6 = vector.multi_reduction <add>, %5, %cst [1] : vector<2x32x512xf32> to vector<2x512xf32>
    %7 = arith.addf %3, %6 : vector<2x512xf32>
    %c0_5 = arith.constant 0 : index
    %c0_6 = arith.constant 0 : index
    %8 = vector.load %arg6[%c0_5, %c0_6] : memref<2x512xf32, #tpu.memory_space<vmem>>, vector<2x512xf32>
    tpu.vector_store %arg6[%c0_5, %c0_6], %7 {strides = array<i32>} : memref<2x512xf32, #tpu.memory_space<vmem>>, vector<2x512xf32>,
    %c1_i32 = arith.constant 1 : i32
    %9 = arith.cmpi eq, %arg1, %c1_i32 : i32
    %10 = arith.extui %9 : i1 to i32
    %c0_i32_7 = arith.constant 0 : i32
    %11 = arith.cmpi ne, %10, %c0_i32_7 : i32
    scf.if %11 {
      %c0_8 = arith.constant 0 : index
      %c0_9 = arith.constant 0 : index
      %12 = vector.load %arg6[%c0_8, %c0_9] : memref<2x512xf32, #tpu.memory_space<vmem>>, vector<2x512xf32>
      %cst_10 = arith.constant 1.562500e-02 : f32
      %13 = vector.broadcast %cst_10 : f32 to vector<2x512xf32>
      %14 = arith.mulf %12, %13 : vector<2x512xf32>
      %c0_11 = arith.constant 0 : index
      %c0_12 = arith.constant 0 : index
      %15 = vector.load %arg3[%c0_11, %c0_12] : memref<512x384xf32, #tpu.memory_space<vmem>>, vector<512x384xf32>
      %cst_13 = arith.constant dense<0.000000e+00> : vector<2x384xf32>
      %16 = tpu.matmul %14, %15, %cst_13 {dimension_numbers = #tpu.dot_dimension_numbers<[1], [0], [0], [1], [0, 0, 1, 1], [], []>} : vector<2x512xf32>, vector<512x384xf32>, vector<2x384xf32> -> vector<2x384xf32>
      %c0_14 = arith.constant 0 : index
      %c0_15 = arith.constant 0 : index
      %17 = vector.load %arg4[%c0_14, %c0_15] : memref<1x384xf32, #tpu.memory_space<vmem>>, vector<1x384xf32>
      %18 = vector.broadcast %17 : vector<1x384xf32> to vector<2x384xf32>
      %19 = arith.addf %16, %18 : vector<2x384xf32>
      %c0_16 = arith.constant 0 : index
      %c0_17 = arith.constant 0 : index
      %20 = vector.load %arg5[%c0_16, %c0_17] : memref<2x384xf32, #tpu.memory_space<vmem>>, vector<2x384xf32>
      tpu.vector_store %arg5[%c0_16, %c0_17], %19 {strides = array<i32>} : memref<2x384xf32, #tpu.memory_space<vmem>>, vector<2x384xf32>,
    } else {
    }
    return
  }
  func.func @transform_0(%arg0: i32, %arg1: i32) -> (i32, i32, i32) {
    %c0_i32 = arith.constant 0 : i32
    %c0_i32_0 = arith.constant 0 : i32
    return %arg0, %arg1, %c0_i32 : i32, i32, i32
  }
  func.func @transform_1(%arg0: i32, %arg1: i32) -> (i32, i32) {
    %c0_i32 = arith.constant 0 : i32
    %c0_i32_0 = arith.constant 0 : i32
    %c0_i32_1 = arith.constant 0 : i32
    return %c0_i32, %c0_i32_0 : i32, i32
  }
  func.func @transform_2(%arg0: i32, %arg1: i32) -> (i32, i32) {
    %c0_i32 = arith.constant 0 : i32
    %c0_i32_0 = arith.constant 0 : i32
    %c0_i32_1 = arith.constant 0 : i32
    return %c0_i32, %c0_i32_0 : i32, i32
  }
  func.func @transform_3(%arg0: i32, %arg1: i32) -> (i32, i32) {
    %c0_i32 = arith.constant 0 : i32
    %c0_i32_0 = arith.constant 0 : i32
    return %arg0, %c0_i32 : i32, i32
  }
}

</mosaic_0001>

<llo_original>
// kernel: tpu_custom_call.1
$region0: #{tpu_custom_call.1}
  #allocation0 [shape = 'u32[]', space=smem, size = 0x4, offset = 0x4, fixed_abs, tag = 'smem constant byte address 0x4 - core index']
  #allocation1 [shape = 'u32[144,128]{1,0:T(1,128)}', space=vmem, size = 0x12000, scoped, tag = 'internal scratch']
  #allocation2 [shape = 'f32[2,512]{1,0:T(2,128)}', space=vmem, size = 0x1000, scoped, tag = 'scratch operand']
  #allocation9 [shape = 's32[]', space=sflag, size = 0x4, offset = 0, fixed_abs, tag = 'sflag constant byte address 0x0 - dummy sync flag']
  %s0 = inlined_call_operand.hbm [shape: bf16[2,64,512], index: 0, kind: input, shape index: {}]
  %s1 = inlined_call_operand.hbm [shape: f32[512,384], index: 1, kind: input, shape index: {}]
  %s2 = inlined_call_operand.vmem [shape: f32[1,384], index: 2, kind: input, shape index: {}]
  %s3 = inlined_call_operand.hbm [shape: f32[2,384], index: 3, kind: output, shape index: {}]
  %s4 = sld [smem:[#allocation0]]
  $region61: #{tpu_custom_call.1} parent=0
    _
  %s6 = ssub.s32 1, %s4
  %s7 = scalar_select 0, %s6, %s4
  $region1: #{tpu_custom_call.1} parent=0
    #allocation3 [shape = 'u8[131072]{0}', space=vmem, size = 0x20000, scoped, tag = 'input window, operand 0']
    #allocation4 [shape = 's32[2]{0}', space=sflag, size = 0x8, scoped, tag = 'scoped memory for tpu_custom_call.1']
    #allocation5 [shape = 's32[2]{0}', space=sflag, size = 0x8, scoped, tag = 'scoped memory for tpu_custom_call.1']
    #allocation6 [shape = 'u8[786432]{0}', space=vmem, size = 0xc0000, scoped, tag = 'input window, operand 1, single buffered']
    #allocation7 [shape = 's32[1]{0}', space=sflag, size = 0x4, scoped, tag = 'scoped memory for tpu_custom_call.1']
    #allocation8 [shape = 'u8[3072]{0}', space=vmem, size = 0xc00, scoped, tag = 'output window, operand 0, single buffered']
    %8 = vsyncpa [#allocation4], 0
    %s9 = scalar_lea.sflag [#allocation4], 1
    %10 = vsyncpa %s9, 0
    %11 = vsyncpa [#allocation7], 0
    %12 = vsyncpa [#allocation5], 0
    loop: start=0, step=1, limit=4
    $region2: #{tpu_custom_call.1} parent=1 // loop_pre_header
      _
    $region3: #{tpu_custom_call.1} parent=1 // loop_header
      %s14 = sphi 0, %s18
      %p15 = scmp.ge.s32.totalorder %s14, 4
      %s21 = sphi 0, %s33
      %s22 = sphi 0, %s29
      %s23 = sphi 0, %s21
      %s24 = sphi 0, %s22
      %s25 = sphi 0, %s23
      %s26 = sphi 0, %s24
      %s38 = sphi 0, %s40
      %s41 = sphi 0, %s38
      %s42 = sphi 0, %s41
      %s58 = sphi 0, %s42
      %s62 = sphi 0, %s62
      %s64 = sphi 0, %s62
      %s65 = sphi 0, %s64
      %s79 = sphi 0, %s65
      %s83 = sphi 0, %s83
      %s85 = sphi 0, %s83
      %s86 = sphi 0, %s85
      %s100 = sphi 0, %s86
      %s106 = sphi 0, %s108
      %s109 = sphi 0, %s106
      %s110 = sphi 0, %s109
      %s126 = sphi 0, %s110
    $region4: #{tpu_custom_call.1} parent=1 // loop_header_branch
      %17 = sbr.rel (%p15) target = $region8
    $region5: #{tpu_custom_call.1} parent=1 // loop_body
      %s19 = ssub.s32 %s14, 1
      %s20 = ssub.s32 %s14, 2
      %s27 = sadd.s32 1, %s22
      %p28 = scmp.ge.s32.totalorder %s27, 2
      %s29 = scalar_select %p28, 0, %s27
      %s30 = sadd.s32 1, %s21
      %s31 = scalar_select %p28, %s30, %s21
      %p32 = scmp.ge.s32.totalorder %s31, 1
      %s33 = scalar_select %p32, 0, %s31
      %s34 = ssub.s32 %s21, %s33
      %s35 = ssub.s32 %s22, %s29
      %s36 = sor.u32 %s34, %s35
      %p37 = scmp.eq.s32.totalorder %s36, 0
      %s39 = sadd.s32 %s38, 1
      %s40 = scalar_select %p37, %s38, %s39
      %p43 = pneg %p37
      %p44 = scmp.eq.s32.totalorder %s14, 1
      %p45 = por %p43, %p44
      %p46 = scmp.ne.s32.totalorder %s38, %s41
      %p47 = scmp.eq.s32.totalorder %s14, 0
      %p48 = por %p46, %p47
      %p49 = scmp.ne.s32.totalorder %s38, %s41
      %p50 = scmp.eq.s32.totalorder %s19, 1
      %p51 = por %p49, %p50
      %p52 = scmp.ne.s32.totalorder %s41, %s42
      %p53 = scmp.eq.s32.totalorder %s19, 0
      %p54 = por %p52, %p53
      %p55 = scmp.ne.s32.totalorder %s41, %s42
      %p56 = scmp.eq.s32.totalorder %s20, 1
      %p57 = por %p55, %p56
      %p59 = scmp.ne.s32.totalorder %s42, %s58
      %p60 = scmp.eq.s32.totalorder %s20, 0
      %p61 = por %p59, %p60
      %s63 = sadd.s32 %s62, 1
      %p66 = scmp.eq.s32.totalorder %s14, 1
      %p67 = scmp.ne.s32.totalorder %s62, %s64
      %p68 = scmp.eq.s32.totalorder %s14, 0
      %p69 = por %p67, %p68
      %p70 = scmp.ne.s32.totalorder %s62, %s64
      %p71 = scmp.eq.s32.totalorder %s19, 1
      %p72 = por %p70, %p71
      %p73 = scmp.ne.s32.totalorder %s64, %s65
      %p74 = scmp.eq.s32.totalorder %s19, 0
      %p75 = por %p73, %p74
      %p76 = scmp.ne.s32.totalorder %s64, %s65
      %p77 = scmp.eq.s32.totalorder %s20, 1
      %p78 = por %p76, %p77
      %p80 = scmp.ne.s32.totalorder %s65, %s79
      %p81 = scmp.eq.s32.totalorder %s20, 0
      %p82 = por %p80, %p81
      %s84 = sadd.s32 %s83, 1
      %p87 = scmp.eq.s32.totalorder %s14, 1
      %p88 = scmp.ne.s32.totalorder %s83, %s85
      %p89 = scmp.eq.s32.totalorder %s14, 0
      %p90 = por %p88, %p89
      %p91 = scmp.ne.s32.totalorder %s83, %s85
      %p92 = scmp.eq.s32.totalorder %s19, 1
      %p93 = por %p91, %p92
      %p94 = scmp.ne.s32.totalorder %s85, %s86
      %p95 = scmp.eq.s32.totalorder %s19, 0
      %p96 = por %p94, %p95
      %p97 = scmp.ne.s32.totalorder %s85, %s86
      %p98 = scmp.eq.s32.totalorder %s20, 1
      %p99 = por %p97, %p98
      %p101 = scmp.ne.s32.totalorder %s86, %s100
      %p102 = scmp.eq.s32.totalorder %s20, 0
      %p103 = por %p101, %p102
      %s104 = ssub.s32 %s21, %s33
      %p105 = scmp.eq.s32.totalorder %s104, 0
      %s107 = sadd.s32 %s106, 1
      %s108 = scalar_select %p105, %s106, %s107
      %p111 = pneg %p105
      %p112 = scmp.eq.s32.totalorder %s14, 1
      %p113 = por %p111, %p112
      %p114 = scmp.ne.s32.totalorder %s106, %s109
      %p115 = scmp.eq.s32.totalorder %s14, 0
      %p116 = por %p114, %p115
      %p117 = scmp.ne.s32.totalorder %s106, %s109
      %p118 = scmp.eq.s32.totalorder %s19, 1
      %p119 = por %p117, %p118
      %p120 = scmp.ne.s32.totalorder %s109, %s110
      %p121 = scmp.eq.s32.totalorder %s19, 0
      %p122 = por %p120, %p121
      %p123 = scmp.ne.s32.totalorder %s109, %s110
      %p124 = scmp.eq.s32.totalorder %s20, 1
      %p125 = por %p123, %p124
      %p127 = scmp.ne.s32.totalorder %s110, %s126
      %p128 = scmp.eq.s32.totalorder %s20, 0
      %p129 = por %p127, %p128
      %p130 = scmp.le.s32.totalorder 1, %s14
      %p131 = scmp.lt.s32.totalorder %s14, 3
      %p132 = pnand %p130, %p131
      %p133 = pneg %p132
      // Predicated region
      $region9: #{tpu_custom_call.1} parent=5 // pred_check
        _
      $region10: #{tpu_custom_call.1} parent=5 // pred_check_branch
        %135 = sbr.rel (%p132) target = $region12
      $region11: #{tpu_custom_call.1} parent=5 // pred_region
        %s136 = ssub.s32 %s14, 1
        // Predicated region
        $region13: #{tpu_custom_call.1} parent=11 // pred_check
          %p137 = pneg %p75
        $region14: #{tpu_custom_call.1} parent=11 // pred_check_branch
          %139 = sbr.rel (%p137) target = $region16
        $region15: #{tpu_custom_call.1} parent=11 // pred_region
          %s141 = ssub.s32 24576, 24576
          %142 = vsyncadd [#allocation7], %s141
          %s143 = sshll.u32 [#allocation6], 4
          %s144 = int_to_ptr.vmem [resolvable:$true] %s143
          %149 = dma.hbm_to_vmem [thread:$0]  %s1, 24576, %s144, [#allocation7], 384, 384, 24
        $region16: #{tpu_custom_call.1} parent=11 // pred_fallthru
          _
        // Predicated region
        $region17: #{tpu_custom_call.1} parent=11 // pred_check
          %p150 = pneg %p96
        $region18: #{tpu_custom_call.1} parent=11 // pred_check_branch
          %152 = sbr.rel (%p150) target = $region20
        $region19: #{tpu_custom_call.1} parent=11 // pred_region
          _
        $region20: #{tpu_custom_call.1} parent=11 // pred_fallthru
          _
      $region12: #{tpu_custom_call.1} parent=5 // pred_fallthru
        _
      %p153 = scmp.lt.s32.totalorder %s14, 2
      // Predicated region
      $region21: #{tpu_custom_call.1} parent=5 // pred_check
        %p154 = pneg %p153
      $region22: #{tpu_custom_call.1} parent=5 // pred_check_branch
        %156 = sbr.rel (%p154) target = $region24
      $region23: #{tpu_custom_call.1} parent=5 // pred_region
        // Predicated region
        $region25: #{tpu_custom_call.1} parent=23 // pred_check
          %p157 = pneg %p48
        $region26: #{tpu_custom_call.1} parent=23 // pred_check_branch
          %159 = sbr.rel (%p157) target = $region28
        $region27: #{tpu_custom_call.1} parent=23 // pred_region
          #allocation10 [shape = 'u32[6]{0}', space=smem, size = 0x18, scoped, tag = 'DMA stride descriptor']
          %s160 = sand.u32 %s38, 1
          %s161 = scalar_lea.sflag [#allocation4], %s160
          %s162 = sand.u32 %s38, 1
          %s163 = smul.addr %s162, 128
          %s164 = scalar_lea.vmem [#allocation3], %s163
          %s165 = smul.u32 2, %s21
          %s166 = smul.u32 4, %s22
          %s168 = ssub.s32 2048, 2048
          %169 = vsyncadd %s161, %s168
          %s170 = smul.addr %s166, 4
          %s171 = smul.addr %s165, 32
          %s172 = sadd.s32 %s170, %s171
          %s173 = smul.addr %s172, 64
          %s174 = scalar_lea.hbm %s0, %s173
          %s176 = sshll.u32 1, 14
          %s177 = sxor.u32 4294967295, %s176
          %s179 = sld [smem:[#allocation0]]
          %s180 = sadd.s32 2, %s179
          %s182 = sshll.u32 7, 26
          %s183 = sxor.u32 4294967295, %s182
          %s184 = sand.u32 0, %s183
          %s185 = sshll.u32 %s180, 26
          %s186 = sor.u32 %s184, %s185
          %s187 = sshll.u32 %s164, 4
          %s188 = int_to_ptr.vmem [resolvable:$true] %s187
          %194 = sst [smem:[#allocation10]] 2048
          %s195 = scalar_lea.smem [#allocation10], 1
          %196 = sst [smem:[%s195]] 1024
          %s197 = scalar_lea.smem [#allocation10], 2
          %198 = sst [smem:[%s197]] 4
          %s199 = scalar_lea.smem [#allocation10], 3
          %200 = sst [smem:[%s199]] 256
          %s201 = scalar_lea.smem [#allocation10], 4
          %202 = sst [smem:[%s201]] 256
          %s203 = scalar_lea.smem [#allocation10], 5
          %204 = sst [smem:[%s203]] 16
          %206 = dma.general %s174, 2048, %s188, %s161, [#allocation9], [#allocation10], %s186, 0
        $region28: #{tpu_custom_call.1} parent=23 // pred_fallthru
          _
      $region24: #{tpu_custom_call.1} parent=5 // pred_fallthru
        _
      %p207 = scmp.le.s32.totalorder 1, %s14
      %p208 = scmp.lt.s32.totalorder %s14, 3
      %p209 = pnand %p207, %p208
      %p210 = pneg %p209
      // Predicated region
      $region29: #{tpu_custom_call.1} parent=5 // pred_check
        _
      $region30: #{tpu_custom_call.1} parent=5 // pred_check_branch
        %212 = sbr.rel (%p209) target = $region32
      $region31: #{tpu_custom_call.1} parent=5 // pred_region
        %s213 = ssub.s32 %s14, 1
        %s214 = sand.u32 %s41, 1
        %s215 = scalar_lea.sflag [#allocation4], %s214
        %s216 = sand.u32 %s41, 1
        %s217 = smul.addr %s216, 128
        %s218 = scalar_lea.vmem [#allocation3], %s217
        // Predicated region
        $region33: #{tpu_custom_call.1} parent=31 // pred_check
          %p219 = pneg %p54
        $region34: #{tpu_custom_call.1} parent=31 // pred_check_branch
          %221 = sbr.rel (%p219) target = $region36
        $region35: #{tpu_custom_call.1} parent=31 // pred_region
          %222 = dma.done %s215, 2048
        $region36: #{tpu_custom_call.1} parent=31 // pred_fallthru
          _
        // Predicated region
        $region37: #{tpu_custom_call.1} parent=31 // pred_check
          %p223 = pneg %p75
        $region38: #{tpu_custom_call.1} parent=31 // pred_check_branch
          %225 = sbr.rel (%p223) target = $region40
        $region39: #{tpu_custom_call.1} parent=31 // pred_region
          %226 = dma.done [#allocation7], 24576
        $region40: #{tpu_custom_call.1} parent=31 // pred_fallthru
          _
        %s227 = sand.u32 %s41, 1
        %s228 = scalar_lea.sflag [#allocation4], %s227
        %s229 = sand.u32 %s41, 1
        %s230 = smul.addr %s229, 128
        %s231 = scalar_lea.vmem [#allocation3], %s230
        %p232 = pneg %p54
        %p233 = pneg %p51
        %p234 = pneg %p75
        %p235 = pneg %p72
        %p236 = pneg %p96
        %p237 = pneg %p93
        %p238 = pneg %p122
        %p239 = pneg %p119
        %s240 = smul.u32 2, %s23
        %s241 = smul.u32 4, %s24
        %p242 = scmp.eq.s32.totalorder %s24, 0
        // Predicated region
        $region41: #{tpu_custom_call.1} parent=31 // pred_check
          %p243 = pneg %p242
        $region42: #{tpu_custom_call.1} parent=31 // pred_check_branch
          %245 = sbr.rel (%p243) target = $region44
        $region43: #{tpu_custom_call.1} parent=31 // pred_region
          %246 = vst [vmem:[#allocation2] sm:$0xff] 0.0
        $region44: #{tpu_custom_call.1} parent=31 // pred_fallthru
          _
        %v247 = vld [vmem:[#allocation2] sm:$0xff]
        %v248 = vld [vmem:[%s218] sm:$0xff]
        %v249 = vld [vmem:[%s218 + $0x8] sm:$0xff]
        %v250 = vld [vmem:[%s218 + $0x10] sm:$0xff]
        %v251 = vld [vmem:[%s218 + $0x18] sm:$0xff]
        %v252 = vld [vmem:[%s218 + $0x20] sm:$0xff]
        %v253 = vld [vmem:[%s218 + $0x28] sm:$0xff]
        %v254 = vld [vmem:[%s218 + $0x30] sm:$0xff]
        %v255 = vld [vmem:[%s218 + $0x38] sm:$0xff]
        %v256 = vld [vmem:[%s218 + $0x40] sm:$0xff]
        %v257 = vld [vmem:[%s218 + $0x48] sm:$0xff]
        %v258 = vld [vmem:[%s218 + $0x50] sm:$0xff]
        %v259 = vld [vmem:[%s218 + $0x58] sm:$0xff]
        %v260 = vld [vmem:[%s218 + $0x60] sm:$0xff]
        %v261 = vld [vmem:[%s218 + $0x68] sm:$0xff]
        %v262 = vld [vmem:[%s218 + $0x70] sm:$0xff]
        %v263 = vld [vmem:[%s218 + $0x78] sm:$0xff]
        %v264 = vunpack.c.l.bf16 %v248
        %v265 = vunpack.c.h.bf16 %v248
        %v266 = vunpack.c.l.bf16 %v249
        %v267 = vunpack.c.h.bf16 %v249
        %v268 = vunpack.c.l.bf16 %v250
        %v269 = vunpack.c.h.bf16 %v250
        %v270 = vunpack.c.l.bf16 %v251
        %v271 = vunpack.c.h.bf16 %v251
        %v272 = vunpack.c.l.bf16 %v252
        %v273 = vunpack.c.h.bf16 %v252
        %v274 = vunpack.c.l.bf16 %v253
        %v275 = vunpack.c.h.bf16 %v253
        %v276 = vunpack.c.l.bf16 %v254
        %v277 = vunpack.c.h.bf16 %v254
        %v278 = vunpack.c.l.bf16 %v255
        %v279 = vunpack.c.h.bf16 %v255
        %v280 = vunpack.c.l.bf16 %v256
        %v281 = vunpack.c.h.bf16 %v256
        %v282 = vunpack.c.l.bf16 %v257
        %v283 = vunpack.c.h.bf16 %v257
        %v284 = vunpack.c.l.bf16 %v258
        %v285 = vunpack.c.h.bf16 %v258
        %v286 = vunpack.c.l.bf16 %v259
        %v287 = vunpack.c.h.bf16 %v259
        %v288 = vunpack.c.l.bf16 %v260
        %v289 = vunpack.c.h.bf16 %v260
        %v290 = vunpack.c.l.bf16 %v261
        %v291 = vunpack.c.h.bf16 %v261
        %v292 = vunpack.c.l.bf16 %v262
        %v293 = vunpack.c.h.bf16 %v262
        %v294 = vunpack.c.l.bf16 %v263
        %v295 = vunpack.c.h.bf16 %v263
        %v296 = vadd.f32 %v264, %v268
        %v297 = vadd.f32 %v296, %v272
        %v298 = vadd.f32 %v297, %v276
        %v299 = vrot.slane %v298, 4
        %v300 = vadd.f32 %v298, %v299
        %v301 = vrot.slane %v300, 2
        %v302 = vadd.f32 %v300, %v301
        %v303 = vrot.slane %v302, 1
        %v304 = vadd.f32 %v302, %v303
        %v305 = vadd.f32 %v265, %v269
        %v306 = vadd.f32 %v305, %v273
        %v307 = vadd.f32 %v306, %v277
        %v308 = vrot.slane %v307, 4
        %v309 = vadd.f32 %v307, %v308
        %v310 = vrot.slane %v309, 2
        %v311 = vadd.f32 %v309, %v310
        %v312 = vrot.slane %v311, 1
        %v313 = vadd.f32 %v311, %v312
        %v314 = vadd.f32 %v266, %v270
        %v315 = vadd.f32 %v314, %v274
        %v316 = vadd.f32 %v315, %v278
        %v317 = vrot.slane %v316, 4
        %v318 = vadd.f32 %v316, %v317
        %v319 = vrot.slane %v318, 2
        %v320 = vadd.f32 %v318, %v319
        %v321 = vrot.slane %v320, 1
        %v322 = vadd.f32 %v320, %v321
        %v323 = vadd.f32 %v267, %v271
        %v324 = vadd.f32 %v323, %v275
        %v325 = vadd.f32 %v324, %v279
        %v326 = vrot.slane %v325, 4
        %v327 = vadd.f32 %v325, %v326
        %v328 = vrot.slane %v327, 2
        %v329 = vadd.f32 %v327, %v328
        %v330 = vrot.slane %v329, 1
        %v331 = vadd.f32 %v329, %v330
        %v332 = vadd.f32 %v280, %v284
        %v333 = vadd.f32 %v332, %v288
        %v334 = vadd.f32 %v333, %v292
        %v335 = vrot.slane %v334, 4
        %v336 = vadd.f32 %v334, %v335
        %v337 = vrot.slane %v336, 2
        %v338 = vadd.f32 %v336, %v337
        %v339 = vrot.slane %v338, 1
        %v340 = vadd.f32 %v338, %v339
        %v341 = vadd.f32 %v281, %v285
        %v342 = vadd.f32 %v341, %v289
        %v343 = vadd.f32 %v342, %v293
        %v344 = vrot.slane %v343, 4
        %v345 = vadd.f32 %v343, %v344
        %v346 = vrot.slane %v345, 2
        %v347 = vadd.f32 %v345, %v346
        %v348 = vrot.slane %v347, 1
        %v349 = vadd.f32 %v347, %v348
        %v350 = vadd.f32 %v282, %v286
        %v351 = vadd.f32 %v350, %v290
        %v352 = vadd.f32 %v351, %v294
        %v353 = vrot.slane %v352, 4
        %v354 = vadd.f32 %v352, %v353
        %v355 = vrot.slane %v354, 2
        %v356 = vadd.f32 %v354, %v355
        %v357 = vrot.slane %v356, 1
        %v358 = vadd.f32 %v356, %v357
        %v359 = vadd.f32 %v283, %v287
        %v360 = vadd.f32 %v359, %v291
        %v361 = vadd.f32 %v360, %v295
        %v362 = vrot.slane %v361, 4
        %v363 = vadd.f32 %v361, %v362
        %v364 = vrot.slane %v363, 2
        %v365 = vadd.f32 %v363, %v364
        %v366 = vrot.slane %v365, 1
        %v367 = vadd.f32 %v365, %v366
        %v376 = vcombine.low %v304, %v313
        %v377 = vcombine.low %v322, %v331
        %v379 = vunpack.c.l.s4 1983009808
        %v380 = vunpack.c.0.s8 %v379
        %v381 = vlaneseq
        %v382 = vshrl.u32 %v381, 7
        %v383 = vsub.s32 %v380, %v382
        %v384 = vrot.slane %v376, %v383
        %v386 = vunpack.c.l.s4 1983009808
        %v387 = vunpack.c.0.s8 %v386
        %v388 = vlaneseq
        %v389 = vshrl.u32 %v388, 7
        %v390 = vsub.s32 %v387, %v389
        %v391 = vrot.slane %v377, %v390
        %v392 = vcombine.low %v384, %v391
        %v393 = vcombine.low %v340, %v349
        %v394 = vcombine.low %v358, %v367
        %v396 = vunpack.c.l.s4 1983009808
        %v397 = vunpack.c.0.s8 %v396
        %v398 = vlaneseq
        %v399 = vshrl.u32 %v398, 7
        %v400 = vsub.s32 %v397, %v399
        %v401 = vrot.slane %v393, %v400
        %v403 = vunpack.c.l.s4 1983009808
        %v404 = vunpack.c.0.s8 %v403
        %v405 = vlaneseq
        %v406 = vshrl.u32 %v405, 7
        %v407 = vsub.s32 %v404, %v406
        %v408 = vrot.slane %v394, %v407
        %v409 = vcombine.low %v401, %v408
        %vm410 = vcmask 1044484
        %v411 = vsel %vm410, %v392, %v392
        %vm412 = vcmask 1046534
        %v413 = vsel %vm412, %v392, %v411
        %v414 = vrot.slane %v409, 7
        %vm415 = vcmask 1041409
        %v416 = vsel %vm415, %v414, %v413
        %vm417 = vcmask 1043459
        %v418 = vsel %vm417, %v414, %v416
        %vm419 = vcmask 1045509
        %v420 = vsel %vm419, %v414, %v418
        %vm421 = vcmask 1047559
        %v422 = vsel %vm421, %v414, %v420
        %v424 = vadd.f32 %v247, %v422
        %425 = vst [vmem:[#allocation2] sm:$0xff] %v424
        %p426 = scmp.eq.s32.totalorder %s24, 1
        // Predicated region
        $region45: #{tpu_custom_call.1} parent=31 // pred_check
          %p427 = pneg %p426
        $region46: #{tpu_custom_call.1} parent=31 // pred_check_branch
          %429 = sbr.rel (%p427) target = $region48
        $region47: #{tpu_custom_call.1} parent=31 // pred_region
          %v430 = vld [vmem:[#allocation2] sm:$0xff]
          %v431 = vmul.f32 %v430, 0.015625
          %v432 = vld [vmem:[#allocation6] sm:$0xff]
          %v433 = vld [vmem:[#allocation6 + $0x8] sm:$0xff]
          %v434 = vld [vmem:[#allocation6 + $0x10] sm:$0xff]
          %v435 = vld [vmem:[#allocation6 + $0x18] sm:$0xff]
          %v436 = vld [vmem:[#allocation6 + $0x20] sm:$0xff]
          %v437 = vld [vmem:[#allocation6 + $0x28] sm:$0xff]
          %v438 = vld [vmem:[#allocation6 + $0x30] sm:$0xff]
          %v439 = vld [vmem:[#allocation6 + $0x38] sm:$0xff]
          %v440 = vld [vmem:[#allocation6 + $0x40] sm:$0xff]
          %v441 = vld [vmem:[#allocation6 + $0x48] sm:$0xff]
          %v442 = vld [vmem:[#allocation6 + $0x50] sm:$0xff]
          %v443 = vld [vmem:[#allocation6 + $0x58] sm:$0xff]
          %v444 = vld [vmem:[#allocation6 + $0x60] sm:$0xff]
          %v445 = vld [vmem:[#allocation6 + $0x68] sm:$0xff]
          %v446 = vld [vmem:[#allocation6 + $0x70] sm:$0xff]
          %v447 = vld [vmem:[#allocation6 + $0x78] sm:$0xff]
          %v448 = vld [vmem:[#allocation6 + $0x80] sm:$0xff]
          %v449 = vld [vmem:[#allocation6 + $0x88] sm:$0xff]
          %v450 = vld [vmem:[#allocation6 + $0x90] sm:$0xff]
          %v451 = vld [vmem:[#allocation6 + $0x98] sm:$0xff]
          %v452 = vld [vmem:[#allocation6 + $0xa0] sm:$0xff]
          %v453 = vld [vmem:[#allocation6 + $0xa8] sm:$0xff]
          %v454 = vld [vmem:[#allocation6 + $0xb0] sm:$0xff]
          %v455 = vld [vmem:[#allocation6 + $0xb8] sm:$0xff]
          %v456 = vld [vmem:[#allocation6 + $0xc0] sm:$0xff]
          %v457 = vld [vmem:[#allocation6 + $0xc8] sm:$0xff]
          %v458 = vld [vmem:[#allocation6 + $0xd0] sm:$0xff]
          %v459 = vld [vmem:[#allocation6 + $0xd8] sm:$0xff]
          %v460 = vld [vmem:[#allocation6 + $0xe0] sm:$0xff]
          %v461 = vld [vmem:[#allocation6 + $0xe8] sm:$0xff]
          %v462 = vld [vmem:[#allocation6 + $0xf0] sm:$0xff]
          %v463 = vld [vmem:[#allocation6 + $0xf8] sm:$0xff]
          %v464 = vld [vmem:[#allocation6 + $0x100] sm:$0xff]
          %v465 = vld [vmem:[#allocation6 + $0x108] sm:$0xff]
          %v466 = vld [vmem:[#allocation6 + $0x110] sm:$0xff]
          %v467 = vld [vmem:[#allocation6 + $0x118] sm:$0xff]
          %v468 = vld [vmem:[#allocation6 + $0x120] sm:$0xff]
          %v469 = vld [vmem:[#allocation6 + $0x128] sm:$0xff]
          %v470 = vld [vmem:[#allocation6 + $0x130] sm:$0xff]
          %v471 = vld [vmem:[#allocation6 + $0x138] sm:$0xff]
          %v472 = vld [vmem:[#allocation6 + $0x140] sm:$0xff]
          %v473 = vld [vmem:[#allocation6 + $0x148] sm:$0xff]
          %v474 = vld [vmem:[#allocation6 + $0x150] sm:$0xff]
          %v475 = vld [vmem:[#allocation6 + $0x158] sm:$0xff]
          %v476 = vld [vmem:[#allocation6 + $0x160] sm:$0xff]
          %v477 = vld [vmem:[#allocation6 + $0x168] sm:$0xff]
          %v478 = vld [vmem:[#allocation6 + $0x170] sm:$0xff]
          %v479 = vld [vmem:[#allocation6 + $0x178] sm:$0xff]
          %v480 = vld [vmem:[#allocation6 + $0x180] sm:$0xff]
          %v481 = vld [vmem:[#allocation6 + $0x188] sm:$0xff]
          %v482 = vld [vmem:[#allocation6 + $0x190] sm:$0xff]
          %v483 = vld [vmem:[#allocation6 + $0x198] sm:$0xff]
          %v484 = vld [vmem:[#allocation6 + $0x1a0] sm:$0xff]
          %v485 = vld [vmem:[#allocation6 + $0x1a8] sm:$0xff]
          %v486 = vld [vmem:[#allocation6 + $0x1b0] sm:$0xff]
          %v487 = vld [vmem:[#allocation6 + $0x1b8] sm:$0xff]
          %v488 = vld [vmem:[#allocation6 + $0x1c0] sm:$0xff]
          %v489 = vld [vmem:[#allocation6 + $0x1c8] sm:$0xff]
          %v490 = vld [vmem:[#allocation6 + $0x1d0] sm:$0xff]
          %v491 = vld [vmem:[#allocation6 + $0x1d8] sm:$0xff]
          %v492 = vld [vmem:[#allocation6 + $0x1e0] sm:$0xff]
          %v493 = vld [vmem:[#allocation6 + $0x1e8] sm:$0xff]
          %v494 = vld [vmem:[#allocation6 + $0x1f0] sm:$0xff]
          %v495 = vld [vmem:[#allocation6 + $0x1f8] sm:$0xff]
          %v496 = vld [vmem:[#allocation6 + $0x200] sm:$0xff]
          %v497 = vld [vmem:[#allocation6 + $0x208] sm:$0xff]
          %v498 = vld [vmem:[#allocation6 + $0x210] sm:$0xff]
          %v499 = vld [vmem:[#allocation6 + $0x218] sm:$0xff]
          %v500 = vld [vmem:[#allocation6 + $0x220] sm:$0xff]
          %v501 = vld [vmem:[#allocation6 + $0x228] sm:$0xff]
          %v502 = vld [vmem:[#allocation6 + $0x230] sm:$0xff]
          %v503 = vld [vmem:[#allocation6 + $0x238] sm:$0xff]
          %v504 = vld [vmem:[#allocation6 + $0x240] sm:$0xff]
          %v505 = vld [vmem:[#allocation6 + $0x248] sm:$0xff]
          %v506 = vld [vmem:[#allocation6 + $0x250] sm:$0xff]
          %v507 = vld [vmem:[#allocation6 + $0x258] sm:$0xff]
          %v508 = vld [vmem:[#allocation6 + $0x260] sm:$0xff]
          %v509 = vld [vmem:[#allocation6 + $0x268] sm:$0xff]
          %v510 = vld [vmem:[#allocation6 + $0x270] sm:$0xff]
          %v511 = vld [vmem:[#allocation6 + $0x278] sm:$0xff]
          %v512 = vld [vmem:[#allocation6 + $0x280] sm:$0xff]
          %v513 = vld [vmem:[#allocation6 + $0x288] sm:$0xff]
          %v514 = vld [vmem:[#allocation6 + $0x290] sm:$0xff]
          %v515 = vld [vmem:[#allocation6 + $0x298] sm:$0xff]
          %v516 = vld [vmem:[#allocation6 + $0x2a0] sm:$0xff]
          %v517 = vld [vmem:[#allocation6 + $0x2a8] sm:$0xff]
          %v518 = vld [vmem:[#allocation6 + $0x2b0] sm:$0xff]
          %v519 = vld [vmem:[#allocation6 + $0x2b8] sm:$0xff]
          %v520 = vld [vmem:[#allocation6 + $0x2c0] sm:$0xff]
          %v521 = vld [vmem:[#allocation6 + $0x2c8] sm:$0xff]
          %v522 = vld [vmem:[#allocation6 + $0x2d0] sm:$0xff]
          %v523 = vld [vmem:[#allocation6 + $0x2d8] sm:$0xff]
          %v524 = vld [vmem:[#allocation6 + $0x2e0] sm:$0xff]
          %v525 = vld [vmem:[#allocation6 + $0x2e8] sm:$0xff]
          %v526 = vld [vmem:[#allocation6 + $0x2f0] sm:$0xff]
          %v527 = vld [vmem:[#allocation6 + $0x2f8] sm:$0xff]
          %v528 = vld [vmem:[#allocation6 + $0x300] sm:$0xff]
          %v529 = vld [vmem:[#allocation6 + $0x308] sm:$0xff]
          %v530 = vld [vmem:[#allocation6 + $0x310] sm:$0xff]
          %v531 = vld [vmem:[#allocation6 + $0x318] sm:$0xff]
          %v532 = vld [vmem:[#allocation6 + $0x320] sm:$0xff]
          %v533 = vld [vmem:[#allocation6 + $0x328] sm:$0xff]
          %v534 = vld [vmem:[#allocation6 + $0x330] sm:$0xff]
          %v535 = vld [vmem:[#allocation6 + $0x338] sm:$0xff]
          %v536 = vld [vmem:[#allocation6 + $0x340] sm:$0xff]
          %v537 = vld [vmem:[#allocation6 + $0x348] sm:$0xff]
          %v538 = vld [vmem:[#allocation6 + $0x350] sm:$0xff]
          %v539 = vld [vmem:[#allocation6 + $0x358] sm:$0xff]
          %v540 = vld [vmem:[#allocation6 + $0x360] sm:$0xff]
          %v541 = vld [vmem:[#allocation6 + $0x368] sm:$0xff]
          %v542 = vld [vmem:[#allocation6 + $0x370] sm:$0xff]
          %v543 = vld [vmem:[#allocation6 + $0x378] sm:$0xff]
          %v544 = vld [vmem:[#allocation6 + $0x380] sm:$0xff]
          %v545 = vld [vmem:[#allocation6 + $0x388] sm:$0xff]
          %v546 = vld [vmem:[#allocation6 + $0x390] sm:$0xff]
          %v547 = vld [vmem:[#allocation6 + $0x398] sm:$0xff]
          %v548 = vld [vmem:[#allocation6 + $0x3a0] sm:$0xff]
          %v549 = vld [vmem:[#allocation6 + $0x3a8] sm:$0xff]
          %v550 = vld [vmem:[#allocation6 + $0x3b0] sm:$0xff]
          %v551 = vld [vmem:[#allocation6 + $0x3b8] sm:$0xff]
          %v552 = vld [vmem:[#allocation6 + $0x3c0] sm:$0xff]
          %v553 = vld [vmem:[#allocation6 + $0x3c8] sm:$0xff]
          %v554 = vld [vmem:[#allocation6 + $0x3d0] sm:$0xff]
          %v555 = vld [vmem:[#allocation6 + $0x3d8] sm:$0xff]
          %v556 = vld [vmem:[#allocation6 + $0x3e0] sm:$0xff]
          %v557 = vld [vmem:[#allocation6 + $0x3e8] sm:$0xff]
          %v558 = vld [vmem:[#allocation6 + $0x3f0] sm:$0xff]
          %v559 = vld [vmem:[#allocation6 + $0x3f8] sm:$0xff]
          %v560 = vld [vmem:[#allocation6 + $0x400] sm:$0xff]
          %v561 = vld [vmem:[#allocation6 + $0x408] sm:$0xff]
          %v562 = vld [vmem:[#allocation6 + $0x410] sm:$0xff]
          %v563 = vld [vmem:[#allocation6 + $0x418] sm:$0xff]
          %v564 = vld [vmem:[#allocation6 + $0x420] sm:$0xff]
          %v565 = vld [vmem:[#allocation6 + $0x428] sm:$0xff]
          %v566 = vld [vmem:[#allocation6 + $0x430] sm:$0xff]
          %v567 = vld [vmem:[#allocation6 + $0x438] sm:$0xff]
          %v568 = vld [vmem:[#allocation6 + $0x440] sm:$0xff]
          %v569 = vld [vmem:[#allocation6 + $0x448] sm:$0xff]
          %v570 = vld [vmem:[#allocation6 + $0x450] sm:$0xff]
          %v571 = vld [vmem:[#allocation6 + $0x458] sm:$0xff]
          %v572 = vld [vmem:[#allocation6 + $0x460] sm:$0xff]
          %v573 = vld [vmem:[#allocation6 + $0x468] sm:$0xff]
          %v574 = vld [vmem:[#allocation6 + $0x470] sm:$0xff]
          %v575 = vld [vmem:[#allocation6 + $0x478] sm:$0xff]
          %v576 = vld [vmem:[#allocation6 + $0x480] sm:$0xff]
          %v577 = vld [vmem:[#allocation6 + $0x488] sm:$0xff]
          %v578 = vld [vmem:[#allocation6 + $0x490] sm:$0xff]
          %v579 = vld [vmem:[#allocation6 + $0x498] sm:$0xff]
          %v580 = vld [vmem:[#allocation6 + $0x4a0] sm:$0xff]
          %v581 = vld [vmem:[#allocation6 + $0x4a8] sm:$0xff]
          %v582 = vld [vmem:[#allocation6 + $0x4b0] sm:$0xff]
          %v583 = vld [vmem:[#allocation6 + $0x4b8] sm:$0xff]
          %v584 = vld [vmem:[#allocation6 + $0x4c0] sm:$0xff]
          %v585 = vld [vmem:[#allocation6 + $0x4c8] sm:$0xff]
          %v586 = vld [vmem:[#allocation6 + $0x4d0] sm:$0xff]
          %v587 = vld [vmem:[#allocation6 + $0x4d8] sm:$0xff]
          %v588 = vld [vmem:[#allocation6 + $0x4e0] sm:$0xff]
          %v589 = vld [vmem:[#allocation6 + $0x4e8] sm:$0xff]
          %v590 = vld [vmem:[#allocation6 + $0x4f0] sm:$0xff]
          %v591 = vld [vmem:[#allocation6 + $0x4f8] sm:$0xff]
          %v592 = vld [vmem:[#allocation6 + $0x500] sm:$0xff]
          %v593 = vld [vmem:[#allocation6 + $0x508] sm:$0xff]
          %v594 = vld [vmem:[#allocation6 + $0x510] sm:$0xff]
          %v595 = vld [vmem:[#allocation6 + $0x518] sm:$0xff]
          %v596 = vld [vmem:[#allocation6 + $0x520] sm:$0xff]
          %v597 = vld [vmem:[#allocation6 + $0x528] sm:$0xff]
          %v598 = vld [vmem:[#allocation6 + $0x530] sm:$0xff]
          %v599 = vld [vmem:[#allocation6 + $0x538] sm:$0xff]
          %v600 = vld [vmem:[#allocation6 + $0x540] sm:$0xff]
          %v601 = vld [vmem:[#allocation6 + $0x548] sm:$0xff]
          %v602 = vld [vmem:[#allocation6 + $0x550] sm:$0xff]
          %v603 = vld [vmem:[#allocation6 + $0x558] sm:$0xff]
          %v604 = vld [vmem:[#allocation6 + $0x560] sm:$0xff]
          %v605 = vld [vmem:[#allocation6 + $0x568] sm:$0xff]
          %v606 = vld [vmem:[#allocation6 + $0x570] sm:$0xff]
          %v607 = vld [vmem:[#allocation6 + $0x578] sm:$0xff]
          %v608 = vld [vmem:[#allocation6 + $0x580] sm:$0xff]
          %v609 = vld [vmem:[#allocation6 + $0x588] sm:$0xff]
          %v610 = vld [vmem:[#allocation6 + $0x590] sm:$0xff]
          %v611 = vld [vmem:[#allocation6 + $0x598] sm:$0xff]
          %v612 = vld [vmem:[#allocation6 + $0x5a0] sm:$0xff]
          %v613 = vld [vmem:[#allocation6 + $0x5a8] sm:$0xff]
          %v614 = vld [vmem:[#allocation6 + $0x5b0] sm:$0xff]
          %v615 = vld [vmem:[#allocation6 + $0x5b8] sm:$0xff]
          %v616 = vld [vmem:[#allocation6 + $0x5c0] sm:$0xff]
          %v617 = vld [vmem:[#allocation6 + $0x5c8] sm:$0xff]
          %v618 = vld [vmem:[#allocation6 + $0x5d0] sm:$0xff]
          %v619 = vld [vmem:[#allocation6 + $0x5d8] sm:$0xff]
          %v620 = vld [vmem:[#allocation6 + $0x5e0] sm:$0xff]
          %v621 = vld [vmem:[#allocation6 + $0x5e8] sm:$0xff]
          %v622 = vld [vmem:[#allocation6 + $0x5f0] sm:$0xff]
          %v623 = vld [vmem:[#allocation6 + $0x5f8] sm:$0xff]
          %v624 = vld [vmem:[%s2] sm:$0x7]
          %v626 = vlaneseq
          %v627 = vshrl.u32 %v626, 7
          %v628 = vsub.s32 0, %v627
          %v629 = vrot.slane %v624, %v628
          %v630 = vlaneseq
          %v631 = vshrl.u32 %v630, 7
          %v632 = vsub.s32 1, %v631
          %v633 = vrot.slane %v624, %v632
          %v634 = vlaneseq
          %v635 = vshrl.u32 %v634, 7
          %v636 = vsub.s32 2, %v635
          %v637 = vrot.slane %v624, %v636
          %v642 = vcombine.high %v431, %v431
          %v644 = vunpack.c.l.s4 1983009808
          %v645 = vunpack.c.0.s8 %v644
          %v646 = vlaneseq
          %v647 = vshrl.u32 %v646, 7
          %v648 = vsub.s32 %v645, %v647
          %v649 = vrot.slane %v431, %v648
          %v651 = vunpack.c.l.s4 1983009808
          %v652 = vunpack.c.0.s8 %v651
          %v653 = vlaneseq
          %v654 = vshrl.u32 %v653, 7
          %v655 = vsub.s32 %v652, %v654
          %v656 = vrot.slane %v642, %v655
          %v657 = vcombine.high %v649, %v649
          %v658 = vcombine.high %v656, %v656
          %663 = vmatprep.subr.mxu0 %v433
          %664 = vmatpush1.msra.mxu0 %v432
          %665 = vmatprep.subr.mxu0 %v436
          %666 = vmatpush1.msra.mxu0 %v435
          %667 = vmatprep.subr.mxu0 %v439
          %668 = vmatpush1.msra.mxu0 %v438
          %669 = vmatprep.subr.mxu0 %v442
          %670 = vmatpush1.msra.mxu0 %v441
          %671 = vmatprep.subr.mxu0 %v445
          %672 = vmatpush1.msra.mxu0 %v444
          %673 = vmatprep.subr.mxu0 %v448
          %674 = vmatpush1.msra.mxu0 %v447
          %675 = vmatprep.subr.mxu0 %v451
          %676 = vmatpush1.msra.mxu0 %v450
          %677 = vmatprep.subr.mxu0 %v454
          %678 = vmatpush1.msra.mxu0 %v453
          %679 = vmatprep.subr.mxu0 %v457
          %680 = vmatpush1.msra.mxu0 %v456
          %681 = vmatprep.subr.mxu0 %v460
          %682 = vmatpush1.msra.mxu0 %v459
          %683 = vmatprep.subr.mxu0 %v463
          %684 = vmatpush1.msra.mxu0 %v462
          %685 = vmatprep.subr.mxu0 %v466
          %686 = vmatpush1.msra.mxu0 %v465
          %687 = vmatprep.subr.mxu0 %v469
          %688 = vmatpush1.msra.mxu0 %v468
          %689 = vmatprep.subr.mxu0 %v472
          %690 = vmatpush1.msra.mxu0 %v471
          %691 = vmatprep.subr.mxu0 %v475
          %692 = vmatpush1.msra.mxu0 %v474
          %693 = vmatprep.subr.mxu0 %v478
          %694 = vmatpush1.msra.mxu0 %v477
          %695 = vmatprep.subr.mxu0 %v481
          %696 = vmatpush1.msra.mxu0 %v480
          %697 = vmatprep.subr.mxu0 %v484
          %698 = vmatpush1.msra.mxu0 %v483
          %699 = vmatprep.subr.mxu0 %v487
          %700 = vmatpush1.msra.mxu0 %v486
          %701 = vmatprep.subr.mxu0 %v490
          %702 = vmatpush1.msra.mxu0 %v489
          %703 = vmatprep.subr.mxu0 %v493
          %704 = vmatpush1.msra.mxu0 %v492
          %705 = vmatprep.subr.mxu0 %v496
          %706 = vmatpush1.msra.mxu0 %v495
          %707 = vmatprep.subr.mxu0 %v499
          %708 = vmatpush1.msra.mxu0 %v498
          %709 = vmatprep.subr.mxu0 %v502
          %710 = vmatpush1.msra.mxu0 %v501
          %711 = vmatprep.subr.mxu0 %v505
          %712 = vmatpush1.msra.mxu0 %v504
          %713 = vmatprep.subr.mxu0 %v508
          %714 = vmatpush1.msra.mxu0 %v507
          %715 = vmatprep.subr.mxu0 %v511
          %716 = vmatpush1.msra.mxu0 %v510
          %717 = vmatprep.subr.mxu0 %v514
          %718 = vmatpush1.msra.mxu0 %v513
          %719 = vmatprep.subr.mxu0 %v517
          %720 = vmatpush1.msra.mxu0 %v516
          %721 = vmatprep.subr.mxu0 %v520
          %722 = vmatpush1.msra.mxu0 %v519
          %723 = vmatprep.subr.mxu0 %v523
          %724 = vmatpush1.msra.mxu0 %v522
          %725 = vmatprep.subr.mxu0 %v526
          %726 = vmatpush1.msra.mxu0 %v525
          %727 = vmatprep.mubr.f32.mxu0 %v657
          %728 = vmatmul.mubr.f32.gmra.mrb[0].mxu0 %v649
          %v729 = vpop.f32.mrb[0].mxu0
          %v730 = vadd.f32 %v629, %v729
          %v731 = vpop.f32.mrb[0].mxu0
          %v732 = vadd.f32 %v633, %v731
          %733 = vdwg.mxu0
          %734 = vmatprep.subr.mxu0 %v529
          %735 = vmatpush1.msra.mxu0 %v528
          %736 = vmatprep.subr.mxu0 %v532
          %737 = vmatpush1.msra.mxu0 %v531
          %738 = vmatprep.subr.mxu0 %v535
          %739 = vmatpush1.msra.mxu0 %v534
          %740 = vmatprep.subr.mxu0 %v538
          %741 = vmatpush1.msra.mxu0 %v537
          %742 = vmatprep.subr.mxu0 %v541
          %743 = vmatpush1.msra.mxu0 %v540
          %744 = vmatprep.subr.mxu0 %v544
          %745 = vmatpush1.msra.mxu0 %v543
          %746 = vmatprep.subr.mxu0 %v547
          %747 = vmatpush1.msra.mxu0 %v546
          %748 = vmatprep.subr.mxu0 %v550
          %749 = vmatpush1.msra.mxu0 %v549
          %750 = vmatprep.subr.mxu0 %v553
          %751 = vmatpush1.msra.mxu0 %v552
          %752 = vmatprep.subr.mxu0 %v556
          %753 = vmatpush1.msra.mxu0 %v555
          %754 = vmatprep.subr.mxu0 %v559
          %755 = vmatpush1.msra.mxu0 %v558
          %756 = vmatprep.subr.mxu0 %v562
          %757 = vmatpush1.msra.mxu0 %v561
          %758 = vmatprep.subr.mxu0 %v565
          %759 = vmatpush1.msra.mxu0 %v564
          %760 = vmatprep.subr.mxu0 %v568
          %761 = vmatpush1.msra.mxu0 %v567
          %762 = vmatprep.subr.mxu0 %v571
          %763 = vmatpush1.msra.mxu0 %v570
          %764 = vmatprep.subr.mxu0 %v574
          %765 = vmatpush1.msra.mxu0 %v573
          %766 = vmatprep.subr.mxu0 %v577
          %767 = vmatpush1.msra.mxu0 %v576
          %768 = vmatprep.subr.mxu0 %v580
          %769 = vmatpush1.msra.mxu0 %v579
          %770 = vmatprep.subr.mxu0 %v583
          %771 = vmatpush1.msra.mxu0 %v582
          %772 = vmatprep.subr.mxu0 %v586
          %773 = vmatpush1.msra.mxu0 %v585
          %774 = vmatprep.subr.mxu0 %v589
          %775 = vmatpush1.msra.mxu0 %v588
          %776 = vmatprep.subr.mxu0 %v592
          %777 = vmatpush1.msra.mxu0 %v591
          %778 = vmatprep.subr.mxu0 %v595
          %779 = vmatpush1.msra.mxu0 %v594
          %780 = vmatprep.subr.mxu0 %v598
          %781 = vmatpush1.msra.mxu0 %v597
          %782 = vmatprep.subr.mxu0 %v601
          %783 = vmatpush1.msra.mxu0 %v600
          %784 = vmatprep.subr.mxu0 %v604
          %785 = vmatpush1.msra.mxu0 %v603
          %786 = vmatprep.subr.mxu0 %v607
          %787 = vmatpush1.msra.mxu0 %v606
          %788 = vmatprep.subr.mxu0 %v610
          %789 = vmatpush1.msra.mxu0 %v609
          %790 = vmatprep.subr.mxu0 %v613
          %791 = vmatpush1.msra.mxu0 %v612
          %792 = vmatprep.subr.mxu0 %v616
          %793 = vmatpush1.msra.mxu0 %v615
          %794 = vmatprep.subr.mxu0 %v619
          %795 = vmatpush1.msra.mxu0 %v618
          %796 = vmatprep.subr.mxu0 %v622
          %797 = vmatpush1.msra.mxu0 %v621
          %798 = vmatprep.mubr.f32.mxu0 %v658
          %799 = vmatmul.mubr.f32.gmra.mrb[0].mxu0 %v656
          %v800 = vpop.f32.mrb[0].mxu0
          %v801 = vadd.f32 %v730, %v800
          %v802 = vpop.f32.mrb[0].mxu0
          %v803 = vadd.f32 %v732, %v802
          %804 = vdwg.mxu0
          %805 = vmatprep.subr.mxu0 0.0
          %806 = vmatpush1.msra.mxu0 %v434
          %807 = vmatprep.subr.mxu0 0.0
          %808 = vmatpush1.msra.mxu0 %v437
          %809 = vmatprep.subr.mxu0 0.0
          %810 = vmatpush1.msra.mxu0 %v440
          %811 = vmatprep.subr.mxu0 0.0
          %812 = vmatpush1.msra.mxu0 %v443
          %813 = vmatprep.subr.mxu0 0.0
          %814 = vmatpush1.msra.mxu0 %v446
          %815 = vmatprep.subr.mxu0 0.0
          %816 = vmatpush1.msra.mxu0 %v449
          %817 = vmatprep.subr.mxu0 0.0
          %818 = vmatpush1.msra.mxu0 %v452
          %819 = vmatprep.subr.mxu0 0.0
          %820 = vmatpush1.msra.mxu0 %v455
          %821 = vmatprep.subr.mxu0 0.0
          %822 = vmatpush1.msra.mxu0 %v458
          %823 = vmatprep.subr.mxu0 0.0
          %824 = vmatpush1.msra.mxu0 %v461
          %825 = vmatprep.subr.mxu0 0.0
          %826 = vmatpush1.msra.mxu0 %v464
          %827 = vmatprep.subr.mxu0 0.0
          %828 = vmatpush1.msra.mxu0 %v467
          %829 = vmatprep.subr.mxu0 0.0
          %830 = vmatpush1.msra.mxu0 %v470
          %831 = vmatprep.subr.mxu0 0.0
          %832 = vmatpush1.msra.mxu0 %v473
          %833 = vmatprep.subr.mxu0 0.0
          %834 = vmatpush1.msra.mxu0 %v476
          %835 = vmatprep.subr.mxu0 0.0
          %836 = vmatpush1.msra.mxu0 %v479
          %837 = vmatprep.subr.mxu0 0.0
          %838 = vmatpush1.msra.mxu0 %v482
          %839 = vmatprep.subr.mxu0 0.0
          %840 = vmatpush1.msra.mxu0 %v485
          %841 = vmatprep.subr.mxu0 0.0
          %842 = vmatpush1.msra.mxu0 %v488
          %843 = vmatprep.subr.mxu0 0.0
          %844 = vmatpush1.msra.mxu0 %v491
          %845 = vmatprep.subr.mxu0 0.0
          %846 = vmatpush1.msra.mxu0 %v494
          %847 = vmatprep.subr.mxu0 0.0
          %848 = vmatpush1.msra.mxu0 %v497
          %849 = vmatprep.subr.mxu0 0.0
          %850 = vmatpush1.msra.mxu0 %v500
          %851 = vmatprep.subr.mxu0 0.0
          %852 = vmatpush1.msra.mxu0 %v503
          %853 = vmatprep.subr.mxu0 0.0
          %854 = vmatpush1.msra.mxu0 %v506
          %855 = vmatprep.subr.mxu0 0.0
          %856 = vmatpush1.msra.mxu0 %v509
          %857 = vmatprep.subr.mxu0 0.0
          %858 = vmatpush1.msra.mxu0 %v512
          %859 = vmatprep.subr.mxu0 0.0
          %860 = vmatpush1.msra.mxu0 %v515
          %861 = vmatprep.subr.mxu0 0.0
          %862 = vmatpush1.msra.mxu0 %v518
          %863 = vmatprep.subr.mxu0 0.0
          %864 = vmatpush1.msra.mxu0 %v521
          %865 = vmatprep.subr.mxu0 0.0
          %866 = vmatpush1.msra.mxu0 %v524
          %867 = vmatprep.subr.mxu0 0.0
          %868 = vmatpush1.msra.mxu0 %v527
          %869 = vmatprep.mubr.f32.mxu0 %v657
          %870 = vmatmul.mubr.f32.gmra.mrb[0].mxu0 %v649
          %v871 = vpop.f32.mrb[0].mxu0
          %v872 = vadd.f32 %v637, %v871
          %v873 = vpop.f32.mrb[0].mxu0
          %874 = vdwg.mxu0
          %875 = vmatprep.subr.mxu0 0.0
          %876 = vmatpush1.msra.mxu0 %v530
          %877 = vmatprep.subr.mxu0 0.0
          %878 = vmatpush1.msra.mxu0 %v533
          %879 = vmatprep.subr.mxu0 0.0
          %880 = vmatpush1.msra.mxu0 %v536
          %881 = vmatprep.subr.mxu0 0.0
          %882 = vmatpush1.msra.mxu0 %v539
          %883 = vmatprep.subr.mxu0 0.0
          %884 = vmatpush1.msra.mxu0 %v542
          %885 = vmatprep.subr.mxu0 0.0
          %886 = vmatpush1.msra.mxu0 %v545
          %887 = vmatprep.subr.mxu0 0.0
          %888 = vmatpush1.msra.mxu0 %v548
          %889 = vmatprep.subr.mxu0 0.0
          %890 = vmatpush1.msra.mxu0 %v551
          %891 = vmatprep.subr.mxu0 0.0
          %892 = vmatpush1.msra.mxu0 %v554
          %893 = vmatprep.subr.mxu0 0.0
          %894 = vmatpush1.msra.mxu0 %v557
          %895 = vmatprep.subr.mxu0 0.0
          %896 = vmatpush1.msra.mxu0 %v560
          %897 = vmatprep.subr.mxu0 0.0
          %898 = vmatpush1.msra.mxu0 %v563
          %899 = vmatprep.subr.mxu0 0.0
          %900 = vmatpush1.msra.mxu0 %v566
          %901 = vmatprep.subr.mxu0 0.0
          %902 = vmatpush1.msra.mxu0 %v569
          %903 = vmatprep.subr.mxu0 0.0
          %904 = vmatpush1.msra.mxu0 %v572
          %905 = vmatprep.subr.mxu0 0.0
          %906 = vmatpush1.msra.mxu0 %v575
          %907 = vmatprep.subr.mxu0 0.0
          %908 = vmatpush1.msra.mxu0 %v578
          %909 = vmatprep.subr.mxu0 0.0
          %910 = vmatpush1.msra.mxu0 %v581
          %911 = vmatprep.subr.mxu0 0.0
          %912 = vmatpush1.msra.mxu0 %v584
          %913 = vmatprep.subr.mxu0 0.0
          %914 = vmatpush1.msra.mxu0 %v587
          %915 = vmatprep.subr.mxu0 0.0
          %916 = vmatpush1.msra.mxu0 %v590
          %917 = vmatprep.subr.mxu0 0.0
          %918 = vmatpush1.msra.mxu0 %v593
          %919 = vmatprep.subr.mxu0 0.0
          %920 = vmatpush1.msra.mxu0 %v596
          %921 = vmatprep.subr.mxu0 0.0
          %922 = vmatpush1.msra.mxu0 %v599
          %923 = vmatprep.subr.mxu0 0.0
          %924 = vmatpush1.msra.mxu0 %v602
          %925 = vmatprep.subr.mxu0 0.0
          %926 = vmatpush1.msra.mxu0 %v605
          %927 = vmatprep.subr.mxu0 0.0
          %928 = vmatpush1.msra.mxu0 %v608
          %929 = vmatprep.subr.mxu0 0.0
          %930 = vmatpush1.msra.mxu0 %v611
          %931 = vmatprep.subr.mxu0 0.0
          %932 = vmatpush1.msra.mxu0 %v614
          %933 = vmatprep.subr.mxu0 0.0
          %934 = vmatpush1.msra.mxu0 %v617
          %935 = vmatprep.subr.mxu0 0.0
          %936 = vmatpush1.msra.mxu0 %v620
          %937 = vmatprep.subr.mxu0 0.0
          %938 = vmatpush1.msra.mxu0 %v623
          %939 = vmatprep.mubr.f32.mxu0 %v658
          %940 = vmatmul.mubr.f32.gmra.mrb[0].mxu0 %v656
          %v941 = vpop.f32.mrb[0].mxu0
          %v942 = vadd.f32 %v872, %v941
          %v943 = vpop.f32.mrb[0].mxu0
          %944 = vdwg.mxu0
          %v948 = vcombine.low %v801, %v803
          %v950 = vunpack.c.l.s4 1983009808
          %v951 = vunpack.c.0.s8 %v950
          %v952 = vlaneseq
          %v953 = vshrl.u32 %v952, 7
          %v954 = vsub.s32 %v951, %v953
          %v955 = vrot.slane %v948, %v954
          %v957 = vunpack.c.l.s4 1983009808
          %v958 = vunpack.c.0.s8 %v957
          %v959 = vlaneseq
          %v960 = vshrl.u32 %v959, 7
          %v961 = vsub.s32 %v958, %v960
          %v962 = vrot.slane %v942, %v961
          %v963 = vcombine.low %v955, %v962
          %965 = vst [vmem:[#allocation8] sm:$0x3f] %v963
        $region48: #{tpu_custom_call.1} parent=31 // pred_fallthru
          _
        // Predicated region
        $region49: #{tpu_custom_call.1} parent=31 // pred_check
          %p966 = pneg %p119
        $region50: #{tpu_custom_call.1} parent=31 // pred_check_branch
          %968 = sbr.rel (%p966) target = $region52
        $region51: #{tpu_custom_call.1} parent=31 // pred_region
          %s970 = ssub.s32 96, 96
          %971 = vsyncadd [#allocation5], %s970
          %s972 = smul.addr %s23, 3
          %s973 = smul.addr %s972, 32
          %s974 = scalar_lea.hbm %s3, %s973
          %s976 = sshll.u32 [#allocation8], 4
          %s977 = int_to_ptr.vmem [resolvable:$true] %s976
          %979 = dma.vmem_to_hbm [thread:$0]  %s977, 96, %s974, [#allocation5]
        $region52: #{tpu_custom_call.1} parent=31 // pred_fallthru
          _
        // Predicated region
        $region53: #{tpu_custom_call.1} parent=31 // pred_check
          %p980 = pneg %p119
        $region54: #{tpu_custom_call.1} parent=31 // pred_check_branch
          %982 = sbr.rel (%p980) target = $region56
        $region55: #{tpu_custom_call.1} parent=31 // pred_region
          %983 = dma.done [#allocation5], 96
        $region56: #{tpu_custom_call.1} parent=31 // pred_fallthru
          _
      $region32: #{tpu_custom_call.1} parent=5 // pred_fallthru
        _
      %p984 = scmp.le.s32.totalorder 2, %s14
      // Predicated region
      $region57: #{tpu_custom_call.1} parent=5 // pred_check
        %p985 = pneg %p984
      $region58: #{tpu_custom_call.1} parent=5 // pred_check_branch
        %987 = sbr.rel (%p985) target = $region60
      $region59: #{tpu_custom_call.1} parent=5 // pred_region
        %s988 = ssub.s32 %s14, 2
      $region60: #{tpu_custom_call.1} parent=5 // pred_fallthru
        _
    $region6: #{tpu_custom_call.1} parent=1 // loop_footer
      %s18 = sadd.s32 1, %s14
    $region7: #{tpu_custom_call.1} parent=1 // loop_footer_branch
      %13 = sbr.rel target = $region3
    $region8: #{tpu_custom_call.1} parent=1 // loop_exit
      _
    %989 = vsyncpa [#allocation4], 1
    %s990 = scalar_lea.sflag [#allocation4], 1
    %991 = vsyncpa %s990, 1
    %992 = vsyncpa [#allocation7], 1
    %993 = vsyncpa [#allocation5], 1
    %s994 = scalar_lea.sflag [#allocation5], 1
    %995 = vsyncpa %s994, 1

</llo_original>
